<compile_context>
chip_gen: v6e
topology: v6e:2x2x1
jax: 0.10.0
libtpu: 0.0.40
codegen_flags: <defaults>
</compile_context>

<pallas_src>
import functools

import jax
import jax.numpy as jnp
from jax.experimental import pallas as pl
from jax.experimental.pallas import tpu as pltpu


def _round_up(x, m):
    return (x + m - 1) // m * m


def _cdiv(a, b):
    return (a + b - 1) // b


def _vmem_capacity_bytes():
    try:
        return int(pltpu.get_tpu_info().vmem_capacity_bytes)
    except Exception:
        return 64 * 1024 * 1024  # conservative fallback (v7x per-TC VMEM)


def _prompt_extractor_kernel(x_ref, w_ref, o_ref, acc_ref, *, eps):
    """Grid = (noun tiles [parallel], template chunks [arbitrary, innermost]).

    x_ref  : [Tc, tn, D_in_p]   prompt features for this (noun tile, template chunk)
    w_ref  : [D_in_p, D_out_p]  synthetic CLIP text projection, resident in VMEM
    o_ref  : [tn, D_out_p]      averaged & re-normalized text features for this noun tile
    acc_ref: [tn, D_out_p] f32  running sum of per-template L2-normalized features
    """
    t = pl.program_id(1)

    @pl.when(t == 0)
    def _init():
        acc_ref[...] = jnp.zeros_like(acc_ref)

    tc, tn, d_in = x_ref.shape
    d_out = w_ref.shape[1]

    # "encode_text" hot path: one tall (Tc*tn, d_in) x (d_in, d_out) MXU matmul, f32 acc.
    x2d = x_ref[...].reshape(tc * tn, d_in)
    feats = jnp.dot(x2d, w_ref[...], preferred_element_type=jnp.float32)

    # Per-(template, noun) L2 normalization; eps guards zero (padded) rows -> 0, not NaN.
    inv_norm = jax.lax.rsqrt(
        jnp.maximum(jnp.sum(feats * feats, axis=-1, keepdims=True), eps))
    feats = feats * inv_norm

    # mean/||mean|| == sum/||sum||: accumulate the sum, renormalize once at the end.
    acc_ref[...] += jnp.sum(feats.reshape(tc, tn, d_out), axis=0)

    @pl.when(t == pl.num_programs(1) - 1)
    def _finalize():
        summed = acc_ref[...]
        inv_out = jax.lax.rsqrt(
            jnp.maximum(jnp.sum(summed * summed, axis=-1, keepdims=True), eps))
        o_ref[...] = (summed * inv_out).astype(o_ref.dtype)


@functools.partial(jax.jit, static_argnames=("tn", "compute_dtype"))
def prompt_extractor(x, w, *, tn=None, compute_dtype=jnp.bfloat16):
    """x: [T, N, D_in] per-template prompt token features, w: [D_in, D_out].

    Returns [N, D_out] float32 averaged, L2-normalized text features.
    compute_dtype: operand dtype for the MXU (default bf16; pass jnp.float32 for exact,
    or an fp8 dtype on v7x). Accumulation and normalization stay in f32.
    """
    T, N, D_in = x.shape
    assert w.shape[0] == D_in
    D_out = w.shape[1]

    dt = x.dtype if compute_dtype is None else jnp.dtype(compute_dtype)
    itemsize = dt.itemsize
    gran = {4: 8, 2: 16, 1: 32}.get(itemsize, 8)  # packed sublane granularity

    vmem_cap = _vmem_capacity_bytes()

    # Lane-dense padding of embed dims (no-op for real CLIP dims, multiples of 128).
    d_in_p = _round_up(D_in, 128)
    d_out_p = _round_up(D_out, 128)

    # Noun tiling: pad only to the sublane-packing granularity; pick tn so the noun grid
    # has >=2 steps when possible (both v7x TensorCores) and larger tiles on 128 MiB parts.
    n_gran = _round_up(N, gran)
    if tn is None:
        cap_tn = 512 if vmem_cap >= (96 << 20) else 256
        num_noun_tiles = max(2, _cdiv(n_gran, cap_tn))
        tn = min(_round_up(_cdiv(n_gran, num_noun_tiles), gran), n_gran)
    n_p = _round_up(n_gran, tn)

    # Template chunking: cap per-step VMEM (x double-buffer + f32 feats temp) independent
    # of T so the same kernel fits v7x's 64 MiB as well as v5e/v6e's 128 MiB.
    fixed = d_in_p * d_out_p * itemsize + 3 * tn * d_out_p * 4
    per_template = tn * (3 * d_in_p * itemsize + d_out_p * 4)
    budget = int(0.4 * vmem_cap)
    tc_max = max(1, (budget - fixed) // per_template)
    num_t_chunks = _cdiv(T, min(T, tc_max))
    Tc = _cdiv(T, num_t_chunks)
    t_p = num_t_chunks * Tc

    if x.dtype != dt:
        x = x.astype(dt)
    if w.dtype != dt:
        w = w.astype(dt)

    pad_x = ((0, t_p - T), (0, n_p - N), (0, d_in_p - D_in))
    x_p = jnp.pad(x, pad_x) if any(p for _, p in pad_x) else x
    pad_w = ((0, d_in_p - D_in), (0, d_out_p - D_out))
    w_p = jnp.pad(w, pad_w) if any(p for _, p in pad_w) else w

    # Per-step VMEM estimate: x (double-buffered) + reshape copy margin + f32 feats temp +
    # out (double-buffered) + f32 accumulator + resident w. Only raise the scoped limit when
    # needed, never above ~75% of physical VMEM (headroom for compiler scratch).
    vmem_bytes = (2 * Tc * tn * d_in_p * itemsize
                  + Tc * tn * d_in_p * itemsize
                  + Tc * tn * d_out_p * 4
                  + 2 * tn * d_out_p * 4
                  + tn * d_out_p * 4
                  + d_in_p * d_out_p * itemsize)
    vmem_limit = None
    if vmem_bytes > 12 * 1024 * 1024:
        vmem_limit = min(int(vmem_bytes * 1.5) + (1 << 20), int(vmem_cap * 0.75))

    cost = pl.CostEstimate(
        flops=2 * t_p * n_p * d_in_p * d_out_p,
        transcendentals=t_p * n_p + n_p,
        bytes_accessed=(x_p.size * itemsize + w_p.size * itemsize + n_p * d_out_p * 4),
    )

    out = pl.pallas_call(
        functools.partial(_prompt_extractor_kernel, eps=1e-12),
        out_shape=jax.ShapeDtypeStruct((n_p, d_out_p), jnp.float32),
        grid_spec=pltpu.PrefetchScalarGridSpec(
            num_scalar_prefetch=0,
            grid=(n_p // tn, num_t_chunks),
            in_specs=[
                # One template chunk of this noun tile, embed dim lane-padded.
                pl.BlockSpec((Tc, tn, d_in_p), lambda i, t: (t, i, 0)),
                # Projection is constant across the whole grid: one resident VMEM copy
                # instead of a (dead) double-buffered pipelined block.
                pl.BlockSpec(memory_space=pltpu.MemorySpace.VMEM),
            ],
            out_specs=pl.BlockSpec((tn, d_out_p), lambda i, t: (i, 0)),
            scratch_shapes=[pltpu.VMEM((tn, d_out_p), jnp.float32)],
        ),
        compiler_params=pltpu.CompilerParams(
            dimension_semantics=("parallel", "arbitrary"),
            vmem_limit_bytes=vmem_limit,
        ),
        cost_estimate=cost,
    )(x_p, w_p)

    return out[:N, :D_out]


def prompt_extractor_ref(x, w):
    feats = jnp.einsum("tnd,de->tne", x, w).astype(jnp.float32)
    feats = feats / jnp.linalg.norm(feats, axis=-1, keepdims=True)
    mean = feats.mean(axis=0)
    return mean / jnp.linalg.norm(mean, axis=-1, keepdims=True)


if __name__ == "__main__":
    # Small synthetic shapes: 4 prompt templates, 8 nouns, embed 32 -> 32.
    T, N, D_in, D_out = 4, 8, 32, 32

    key = jax.random.PRNGKey(0)
    kx, kw = jax.random.split(key)
    # Deterministic stand-in for "tokenize + clip token embedding" per template.
    x = jax.random.normal(kx, (T, N, D_in), dtype=jnp.float32)
    # Deterministic stand-in for clip_model.text_projection.
    w = jax.random.normal(kw, (D_in, D_out), dtype=jnp.float32) * 0.05

    # TODO(synk): string tokenization of noun_list / the full CLIP text transformer
    # (encode_text) has no Pallas equivalent; it is modeled by the deterministic feature
    # tensor + projection above.

    # Default path: bf16 operands, f32 accumulation / normalization.
    out = jax.block_until_ready(prompt_extractor(x, w))
    assert out.shape == (N, D_out)
    ref_bf16 = prompt_extractor_ref(
        x.astype(jnp.bfloat16).astype(jnp.float32),
        w.astype(jnp.bfloat16).astype(jnp.float32))
    assert jnp.allclose(out, ref_bf16, rtol=5e-3, atol=5e-3), (
        f"bf16 path max abs err {jnp.max(jnp.abs(out - ref_bf16))}"
    )

    # Exact f32 path.
    out32 = jax.block_until_ready(prompt_extractor(x, w, compute_dtype=jnp.float32))
    ref32 = prompt_extractor_ref(x, w)
    assert jnp.allclose(out32, ref32, rtol=1e-5, atol=5e-5), (
        f"f32 path max abs err {jnp.max(jnp.abs(out32 - ref32))}"
    )

    print("KERNEL_OK")
</pallas_src>

<mosaic_0001>
module attributes {stable_mosaic.version = 11 : i64} {
  func.func @_prompt_extractor_kernel(%arg0: i32, %arg1: i32, %arg2: memref<4x16x128xbf16, #tpu.memory_space<vmem>>, %arg3: memref<128x128xbf16, #tpu.memory_space<vmem>>, %arg4: memref<16x128xf32, #tpu.memory_space<vmem>>, %arg5: memref<16x128xf32, #tpu.memory_space<vmem>>) attributes {dimension_semantics = [#tpu.dimension_semantics<parallel>, #tpu.dimension_semantics<arbitrary>], iteration_bounds = array<i64: 1, 1>, scalar_prefetch = 0 : i64, scratch_operands = 1 : i64, tpu.core_type = #tpu.core_type<tc>, window_params = [{transform_indices = @transform_0, window_bounds = array<i64: 4, 16, 128>}, {pipeline_mode = #tpu.pipeline_mode<synchronous>, transform_indices = @transform_1, window_bounds = array<i64: 128, 128>}, {transform_indices = @transform_2, window_bounds = array<i64: 16, 128>}]} {
    %c0_i32 = arith.constant 0 : i32
    %0 = arith.cmpi eq, %arg1, %c0_i32 : i32
    %1 = arith.extui %0 : i1 to i32
    %c0_i32_0 = arith.constant 0 : i32
    %2 = arith.cmpi ne, %1, %c0_i32_0 : i32
    scf.if %2 {
      %cst_14 = arith.constant 0.000000e+00 : f32
      %23 = vector.broadcast %cst_14 : f32 to vector<16x128xf32>
      %c0_15 = arith.constant 0 : index
      %c0_16 = arith.constant 0 : index
      %24 = vector.load %arg5[%c0_15, %c0_16] : memref<16x128xf32, #tpu.memory_space<vmem>>, vector<16x128xf32>
      tpu.vector_store %arg5[%c0_15, %c0_16], %23 {strides = array<i32>} : memref<16x128xf32, #tpu.memory_space<vmem>>, vector<16x128xf32>,
    } else {
    }
    %c0 = arith.constant 0 : index
    %c0_1 = arith.constant 0 : index
    %c0_2 = arith.constant 0 : index
    %3 = vector.load %arg2[%c0, %c0_1, %c0_2] : memref<4x16x128xbf16, #tpu.memory_space<vmem>>, vector<4x16x128xbf16>
    %4 = vector.shape_cast %3 : vector<4x16x128xbf16> to vector<64x128xbf16>
    %c0_3 = arith.constant 0 : index
    %c0_4 = arith.constant 0 : index
    %5 = vector.load %arg3[%c0_3, %c0_4] : memref<128x128xbf16, #tpu.memory_space<vmem>>, vector<128x128xbf16>
    %cst = arith.constant dense<0.000000e+00> : vector<64x128xf32>
    %6 = tpu.matmul %4, %5, %cst {dimension_numbers = #tpu.dot_dimension_numbers<[1], [0], [0], [1], [0, 0, 1, 1], [], []>} : vector<64x128xbf16>, vector<128x128xbf16>, vector<64x128xf32> -> vector<64x128xf32>
    %7 = arith.mulf %6, %6 : vector<64x128xf32>
    %cst_5 = arith.constant dense<0.000000e+00> : vector<64xf32>
    %8 = vector.multi_reduction <add>, %7, %cst_5 [1] : vector<64x128xf32> to vector<64xf32>
    %9 = vector.shape_cast %8 : vector<64xf32> to vector<64x1xf32>
    %cst_6 = arith.constant 9.99999996E-13 : f32
    %10 = vector.broadcast %cst_6 : f32 to vector<64x1xf32>
    %11 = arith.maximumf %9, %10 : vector<64x1xf32>
    %12 = math.rsqrt %11 : vector<64x1xf32>
    %13 = vector.broadcast %12 : vector<64x1xf32> to vector<64x128xf32>
    %14 = arith.mulf %6, %13 : vector<64x128xf32>
    %c0_7 = arith.constant 0 : index
    %c0_8 = arith.constant 0 : index
    %15 = vector.load %arg5[%c0_7, %c0_8] : memref<16x128xf32, #tpu.memory_space<vmem>>, vector<16x128xf32>
    %16 = vector.shape_cast %14 : vector<64x128xf32> to vector<4x16x128xf32>
    %cst_9 = arith.constant dense<0.000000e+00> : vector<16x128xf32>
    %17 = vector.multi_reduction <add>, %16, %cst_9 [0] : vector<4x16x128xf32> to vector<16x128xf32>
    %18 = arith.addf %15, %17 : vector<16x128xf32>
    %c0_10 = arith.constant 0 : index
    %c0_11 = arith.constant 0 : index
    %19 = vector.load %arg5[%c0_10, %c0_11] : memref<16x128xf32, #tpu.memory_space<vmem>>, vector<16x128xf32>
    tpu.vector_store %arg5[%c0_10, %c0_11], %18 {strides = array<i32>} : memref<16x128xf32, #tpu.memory_space<vmem>>, vector<16x128xf32>,
    %c0_i32_12 = arith.constant 0 : i32
    %20 = arith.cmpi eq, %arg1, %c0_i32_12 : i32
    %21 = arith.extui %20 : i1 to i32
    %c0_i32_13 = arith.constant 0 : i32
    %22 = arith.cmpi ne, %21, %c0_i32_13 : i32
    scf.if %22 {
      %c0_14 = arith.constant 0 : index
      %c0_15 = arith.constant 0 : index
      %23 = vector.load %arg5[%c0_14, %c0_15] : memref<16x128xf32, #tpu.memory_space<vmem>>, vector<16x128xf32>
      %24 = arith.mulf %23, %23 : vector<16x128xf32>
      %cst_16 = arith.constant dense<0.000000e+00> : vector<16xf32>
      %25 = vector.multi_reduction <add>, %24, %cst_16 [1] : vector<16x128xf32> to vector<16xf32>
      %26 = vector.shape_cast %25 : vector<16xf32> to vector<16x1xf32>
      %cst_17 = arith.constant 9.99999996E-13 : f32
      %27 = vector.broadcast %cst_17 : f32 to vector<16x1xf32>
      %28 = arith.maximumf %26, %27 : vector<16x1xf32>
      %29 = math.rsqrt %28 : vector<16x1xf32>
      %30 = vector.broadcast %29 : vector<16x1xf32> to vector<16x128xf32>
      %31 = arith.mulf %23, %30 : vector<16x128xf32>
      %c0_18 = arith.constant 0 : index
      %c0_19 = arith.constant 0 : index
      %32 = vector.load %arg4[%c0_18, %c0_19] : memref<16x128xf32, #tpu.memory_space<vmem>>, vector<16x128xf32>
      tpu.vector_store %arg4[%c0_18, %c0_19], %31 {strides = array<i32>} : memref<16x128xf32, #tpu.memory_space<vmem>>, vector<16x128xf32>,
    } else {
    }
    return
  }
  func.func @transform_0(%arg0: i32, %arg1: i32) -> (i32, i32, i32) {
    %c0_i32 = arith.constant 0 : i32
    %c0_i32_0 = arith.constant 0 : i32
    return %arg1, %arg0, %c0_i32 : i32, i32, i32
  }
  func.func @transform_1(%arg0: i32, %arg1: i32) -> (i32, i32) {
    %c0_i32 = arith.constant 0 : i32
    %c0_i32_0 = arith.constant 0 : i32
    %c0_i32_1 = arith.constant 0 : i32
    return %c0_i32, %c0_i32_0 : i32, i32
  }
  func.func @transform_2(%arg0: i32, %arg1: i32) -> (i32, i32) {
    %c0_i32 = arith.constant 0 : i32
    %c0_i32_0 = arith.constant 0 : i32
    return %arg0, %c0_i32 : i32, i32
  }
}

</mosaic_0001>

<llo_original>
// kernel: prompt_extractor.1
$region0: #{prompt_extractor.1}
  #allocation0 [shape = 'u32[]', space=smem, size = 0x4, offset = 0x4, fixed_abs, tag = 'smem constant byte address 0x4 - core index']
  #allocation1 [shape = 'u32[144,128]{1,0:T(1,128)}', space=vmem, size = 0x12000, scoped, tag = 'internal scratch']
  #allocation2 [shape = 'f32[16,128]{1,0:T(8,128)}', space=vmem, size = 0x2000, scoped, tag = 'scratch operand']
  %s0 = inlined_call_operand.vmem [shape: bf16[4,16,128], index: 0, kind: input, shape index: {}]
  %s1 = inlined_call_operand.vmem [shape: bf16[128,128], index: 1, kind: input, shape index: {}]
  %s2 = inlined_call_operand.vmem [shape: f32[16,128], index: 2, kind: output, shape index: {}]
  %s3 = sld [smem:[#allocation0]]
  $region26: #{prompt_extractor.1} parent=0
    _
  %s5 = ssub.s32 1, %s3
  %s6 = scalar_select 0, %s5, %s3
  // Predicated region
  $region2: #{prompt_extractor.1} parent=0 // pred_check
    _
  $region3: #{prompt_extractor.1} parent=0 // pred_check_branch
    %8 = sbr.rel (0) target = $region5
  $region4: #{prompt_extractor.1} parent=0 // pred_region
    _
  $region5: #{prompt_extractor.1} parent=0 // pred_fallthru
    _
  // Predicated region
  $region6: #{prompt_extractor.1} parent=0 // pred_check
    _
  $region7: #{prompt_extractor.1} parent=0 // pred_check_branch
    %10 = sbr.rel (0) target = $region9
  $region8: #{prompt_extractor.1} parent=0 // pred_region
    _
  $region9: #{prompt_extractor.1} parent=0 // pred_fallthru
    _
  %p12 = scmp.eq.s32.totalorder 0, 0
  // Predicated region
  $region10: #{prompt_extractor.1} parent=0 // pred_check
    %p13 = pneg %p12
  $region11: #{prompt_extractor.1} parent=0 // pred_check_branch
    %15 = sbr.rel (%p13) target = $region13
  $region12: #{prompt_extractor.1} parent=0 // pred_region
    %16 = vst [vmem:[#allocation2] sm:$0xff] 0.0
    %17 = vst [vmem:[#allocation2 + $0x8] sm:$0xff] 0.0
  $region13: #{prompt_extractor.1} parent=0 // pred_fallthru
    _
  %v18 = vld [vmem:[%s0] sm:$0xf]
  %v19 = vld [vmem:[%s0 + $0x4] sm:$0xf]
  %v20 = vld [vmem:[%s0 + $0x8] sm:$0xf]
  %v21 = vld [vmem:[%s0 + $0xc] sm:$0xf]
  %v22 = vld [vmem:[%s0 + $0x10] sm:$0xf]
  %v23 = vld [vmem:[%s0 + $0x14] sm:$0xf]
  %v24 = vld [vmem:[%s0 + $0x18] sm:$0xf]
  %v25 = vld [vmem:[%s0 + $0x1c] sm:$0xf]
  %v26 = vld [vmem:[%s1] sm:$0xf]
  %v27 = vld [vmem:[%s1 + $0x4] sm:$0xf]
  %v28 = vld [vmem:[%s1 + $0x8] sm:$0xf]
  %v29 = vld [vmem:[%s1 + $0xc] sm:$0xf]
  %v30 = vld [vmem:[%s1 + $0x10] sm:$0xf]
  %v31 = vld [vmem:[%s1 + $0x14] sm:$0xf]
  %v32 = vld [vmem:[%s1 + $0x18] sm:$0xf]
  %v33 = vld [vmem:[%s1 + $0x1c] sm:$0xf]
  %v34 = vld [vmem:[%s1 + $0x20] sm:$0xf]
  %v35 = vld [vmem:[%s1 + $0x24] sm:$0xf]
  %v36 = vld [vmem:[%s1 + $0x28] sm:$0xf]
  %v37 = vld [vmem:[%s1 + $0x2c] sm:$0xf]
  %v38 = vld [vmem:[%s1 + $0x30] sm:$0xf]
  %v39 = vld [vmem:[%s1 + $0x34] sm:$0xf]
  %v40 = vld [vmem:[%s1 + $0x38] sm:$0xf]
  %v41 = vld [vmem:[%s1 + $0x3c] sm:$0xf]
  %v50 = vunpack.c.l.b16 %v18
  %v51 = vunpack.c.l.b16 %v19
  %v52 = vunpack.c.l.b16 %v20
  %v53 = vunpack.c.l.b16 %v21
  %v54 = vunpack.c.l.b16 %v22
  %v55 = vunpack.c.l.b16 %v23
  %v56 = vunpack.c.l.b16 %v24
  %v57 = vunpack.c.l.b16 %v25
  %v58 = vpack.c.b16 %v51, %v50
  %v59 = vpack.c.b16 %v53, %v52
  %v60 = vpack.c.b16 %v55, %v54
  %v61 = vpack.c.b16 %v57, %v56
  %v82 = vunpack.c.l.b16 %v26
  %v83 = vunpack.c.l.b16 %v27
  %v84 = vunpack.c.l.b16 %v28
  %v85 = vunpack.c.l.b16 %v29
  %v86 = vunpack.c.l.b16 %v30
  %v87 = vunpack.c.l.b16 %v31
  %v88 = vunpack.c.l.b16 %v32
  %v89 = vunpack.c.l.b16 %v33
  %v90 = vunpack.c.l.b16 %v34
  %v91 = vunpack.c.l.b16 %v35
  %v92 = vunpack.c.l.b16 %v36
  %v93 = vunpack.c.l.b16 %v37
  %v94 = vunpack.c.l.b16 %v38
  %v95 = vunpack.c.l.b16 %v39
  %v96 = vunpack.c.l.b16 %v40
  %v97 = vunpack.c.l.b16 %v41
  %v98 = vpack.c.b16 %v83, %v82
  %v99 = vpack.c.b16 %v85, %v84
  %v100 = vpack.c.b16 %v87, %v86
  %v101 = vpack.c.b16 %v89, %v88
  %v102 = vpack.c.b16 %v91, %v90
  %v103 = vpack.c.b16 %v93, %v92
  %v104 = vpack.c.b16 %v95, %v94
  %v105 = vpack.c.b16 %v97, %v96
  %114 = vmatprep.subr.bf16.mxu0 0
  %115 = vmatpush1.bf16.msra.mxu0 %v105
  %116 = vmatprep.subr.bf16.mxu0 0
  %117 = vmatpush1.bf16.msra.mxu0 %v104
  %118 = vmatprep.subr.bf16.mxu0 0
  %119 = vmatpush1.bf16.msra.mxu0 %v103
  %120 = vmatprep.subr.bf16.mxu0 0
  %121 = vmatpush1.bf16.msra.mxu0 %v102
  %122 = vmatprep.subr.bf16.mxu0 0
  %123 = vmatpush1.bf16.msra.mxu0 %v101
  %124 = vmatprep.subr.bf16.mxu0 0
  %125 = vmatpush1.bf16.msra.mxu0 %v100
  %126 = vmatprep.subr.bf16.mxu0 0
  %127 = vmatpush1.bf16.msra.mxu0 %v99
  %128 = vmatprep.subr.bf16.mxu0 0
  %129 = vmatpush1.bf16.msra.mxu0 %v98
  %130 = vmatprep.subr.bf16.mxu0 0
  %131 = vmatpush2.bf16.msra.mxu0 0
  %132 = vmatprep.subr.bf16.mxu0 0
  %133 = vmatpush2.bf16.msra.mxu0 0
  %134 = vmatprep.subr.bf16.mxu0 0
  %135 = vmatpush2.bf16.msra.mxu0 0
  %136 = vmatprep.subr.bf16.mxu0 0
  %137 = vmatpush2.bf16.msra.mxu0 0
  %138 = vmatprep.subr.bf16.mxu0 0
  %139 = vmatpush2.bf16.msra.mxu0 0
  %140 = vmatprep.subr.bf16.mxu0 0
  %141 = vmatpush2.bf16.msra.mxu0 0
  %142 = vmatprep.subr.bf16.mxu0 0
  %143 = vmatpush2.bf16.msra.mxu0 0
  %144 = vmatprep.subr.bf16.mxu0 0
  %145 = vmatpush2.bf16.msra.mxu0 0
  %146 = vmatprep.mubr.bf16.mxu0 0
  %147 = vmatmul.mubr.bf16.gmra.mxu0 %v58
  %v148 = vpop.f32.mrf.mxu0
  %v149 = vadd.f32 0.0, %v148
  %v150 = vpop.f32.mrf.mxu0
  %v151 = vpop.f32.mrf.mxu0
  %v152 = vadd.f32 0.0, %v151
  %v153 = vpop.f32.mrf.mxu0
  %154 = vmatprep.mubr.bf16.mxu0 0
  %155 = vmatmul.mubr.bf16.gmra.mxu0 %v59
  %v156 = vpop.f32.mrf.mxu0
  %v157 = vadd.f32 0.0, %v156
  %v158 = vpop.f32.mrf.mxu0
  %v159 = vpop.f32.mrf.mxu0
  %v160 = vadd.f32 0.0, %v159
  %v161 = vpop.f32.mrf.mxu0
  %162 = vmatprep.mubr.bf16.mxu0 0
  %163 = vmatmul.mubr.bf16.gmra.mxu0 %v60
  %v164 = vpop.f32.mrf.mxu0
  %v165 = vadd.f32 0.0, %v164
  %v166 = vpop.f32.mrf.mxu0
  %v167 = vpop.f32.mrf.mxu0
  %v168 = vadd.f32 0.0, %v167
  %v169 = vpop.f32.mrf.mxu0
  %170 = vmatprep.mubr.bf16.mxu0 0
  %171 = vmatmul.mubr.bf16.gmra.mxu0 %v61
  %v172 = vpop.f32.mrf.mxu0
  %v173 = vadd.f32 0.0, %v172
  %v174 = vpop.f32.mrf.mxu0
  %v175 = vpop.f32.mrf.mxu0
  %v176 = vadd.f32 0.0, %v175
  %v177 = vpop.f32.mrf.mxu0
  %178 = vdwg.mxu0
  %v179 = vmul.f32 %v149, %v149
  %v180 = vmul.f32 %v152, %v152
  %v181 = vmul.f32 %v157, %v157
  %v182 = vmul.f32 %v160, %v160
  %v183 = vmul.f32 %v165, %v165
  %v184 = vmul.f32 %v168, %v168
  %v185 = vmul.f32 %v173, %v173
  %v186 = vmul.f32 %v176, %v176
  %187 = vadd.xlane.f32.xlu0 %v179
  %v188 = vpop.xlane.xlu0 %187
  %189 = vadd.xlane.f32.xlu0 %v180
  %v190 = vpop.xlane.xlu0 %189
  %191 = vadd.xlane.f32.xlu0 %v181
  %v192 = vpop.xlane.xlu0 %191
  %193 = vadd.xlane.f32.xlu0 %v182
  %v194 = vpop.xlane.xlu0 %193
  %195 = vadd.xlane.f32.xlu0 %v183
  %v196 = vpop.xlane.xlu0 %195
  %197 = vadd.xlane.f32.xlu0 %v184
  %v198 = vpop.xlane.xlu0 %197
  %199 = vadd.xlane.f32.xlu0 %v185
  %v200 = vpop.xlane.xlu0 %199
  %201 = vadd.xlane.f32.xlu0 %v186
  %v202 = vpop.xlane.xlu0 %201
  %v203 = vmax.f32 %v188, 1e-12
  %v204 = vmax.f32 %v190, 1e-12
  %v205 = vmax.f32 %v192, 1e-12
  %v206 = vmax.f32 %v194, 1e-12
  %v207 = vmax.f32 %v196, 1e-12
  %v208 = vmax.f32 %v198, 1e-12
  %v209 = vmax.f32 %v200, 1e-12
  %v210 = vmax.f32 %v202, 1e-12
  %v211 = vrsqrt.pop %v203
  %v212 = vrsqrt.pop %v204
  %v213 = vrsqrt.pop %v205
  %v214 = vrsqrt.pop %v206
  %v215 = vrsqrt.pop %v207
  %v216 = vrsqrt.pop %v208
  %v217 = vrsqrt.pop %v209
  %v218 = vrsqrt.pop %v210
  %v219 = vmul.f32 %v149, %v211
  %v220 = vmul.f32 %v152, %v212
  %v221 = vmul.f32 %v157, %v213
  %v222 = vmul.f32 %v160, %v214
  %v223 = vmul.f32 %v165, %v215
  %v224 = vmul.f32 %v168, %v216
  %v225 = vmul.f32 %v173, %v217
  %v226 = vmul.f32 %v176, %v218
  %v227 = vld [vmem:[#allocation2] sm:$0xff]
  %v228 = vld [vmem:[#allocation2 + $0x8] sm:$0xff]
  %v229 = vadd.f32 %v219, %v221
  %v230 = vadd.f32 %v229, %v223
  %v231 = vadd.f32 %v230, %v225
  %v232 = vadd.f32 %v220, %v222
  %v233 = vadd.f32 %v232, %v224
  %v234 = vadd.f32 %v233, %v226
  %v235 = vadd.f32 %v227, %v231
  %v236 = vadd.f32 %v228, %v234
  %237 = vst [vmem:[#allocation2] sm:$0xff] %v235
  %238 = vst [vmem:[#allocation2 + $0x8] sm:$0xff] %v236
  // Predicated region
  $region14: #{prompt_extractor.1} parent=0 // pred_check
    %p239 = pneg %p12
  $region15: #{prompt_extractor.1} parent=0 // pred_check_branch
    %241 = sbr.rel (%p239) target = $region17
  $region16: #{prompt_extractor.1} parent=0 // pred_region
    %v242 = vld [vmem:[#allocation2] sm:$0xff]
    %v243 = vld [vmem:[#allocation2 + $0x8] sm:$0xff]
    %v244 = vmul.f32 %v242, %v242
    %v245 = vmul.f32 %v243, %v243
    %246 = vadd.xlane.f32.xlu0 %v244
    %v247 = vpop.xlane.xlu0 %246
    %248 = vadd.xlane.f32.xlu0 %v245
    %v249 = vpop.xlane.xlu0 %248
    %v250 = vmax.f32 %v247, 1e-12
    %v251 = vmax.f32 %v249, 1e-12
    %v252 = vrsqrt.pop %v250
    %v253 = vrsqrt.pop %v251
    %v254 = vmul.f32 %v242, %v252
    %v255 = vmul.f32 %v243, %v253
    %256 = vst [vmem:[%s2] sm:$0xff] %v254
    %257 = vst [vmem:[%s2 + $0x8] sm:$0xff] %v255
  $region17: #{prompt_extractor.1} parent=0 // pred_fallthru
    _
  // Predicated region
  $region18: #{prompt_extractor.1} parent=0 // pred_check
    _
  $region19: #{prompt_extractor.1} parent=0 // pred_check_branch
    %259 = sbr.rel (0) target = $region21
  $region20: #{prompt_extractor.1} parent=0 // pred_region
    _
  $region21: #{prompt_extractor.1} parent=0 // pred_fallthru
    _
  // Predicated region
  $region22: #{prompt_extractor.1} parent=0 // pred_check
    _
  $region23: #{prompt_extractor.1} parent=0 // pred_check_branch
    %261 = sbr.rel (0) target = $region25
  $region24: #{prompt_extractor.1} parent=0 // pred_region
    _
  $region25: #{prompt_extractor.1} parent=0 // pred_fallthru
    _

</llo_original>
